<compile_context>
chip_gen: v7x
topology: tpu7x:2x2x1
jax: 0.10.0
libtpu: 0.0.40
codegen_flags: <defaults>
</compile_context>

<pallas_src>
import jax
import jax.numpy as jnp
from jax.experimental import pallas as pl
from jax.experimental.pallas import tpu as pltpu


def _masked_mul_packed_kernel(x_ref, keep_ref, expand_ref, o_ref):
    # x_ref / o_ref: (tile_m, 128) lane-dense packed rows (k features per row)
    # keep_ref:      (tile_m, kp)  0/1 per packed feature (f32, zero-padded cols)
    # expand_ref:    (kp, 128)     0/1 lane-expansion matrix
    # MXU does the lane expansion (keep @ expand); VPU does the masking multiply.
    keep = jnp.dot(keep_ref[...], expand_ref[...],
                   preferred_element_type=jnp.float32)
    o_ref[...] = x_ref[...] * keep.astype(x_ref.dtype)


def _masked_mul_kernel(x_ref, keep_ref, o_ref):
    # x_ref / o_ref: (tile_m, H);  keep_ref: (tile_m, 1) broadcasts over lanes.
    o_ref[...] = x_ref[...] * keep_ref[...]


def _pick_tile_m(rows, bytes_per_row):
    """8-aligned row tile: ~6 MiB per block, but keep ~8 grid steps if possible."""
    target_block_bytes = 6 << 20
    budget = max(8, (target_block_bytes // max(1, bytes_per_row)) // 8 * 8)
    split = max(8, (((rows + 7) // 8) + 7) // 8 * 8)   # ~rows/8, rounded up to 8
    tile_m = min(budget, split)
    if tile_m >= rows:
        tile_m = rows                                   # single full-extent block
    return tile_m


def feature_dropout(x, p, seed, *, training=True):
    """Pallas implementation of FeatureDropout.forward.

    x:    (B, F, H) feature embeddings
    p:    dropout probability (static Python float)
    seed: int seed for the mask draw (mirrors torch.rand(B, F) > p)
    """
    if (not training) or p <= 0.0:
        return x

    B, F, H = x.shape
    M = B * F
    itemsize = jnp.dtype(x.dtype).itemsize

    # One Bernoulli(1 - p) per (batch, feature) row — tiny, tiling-independent.
    u = jax.random.uniform(jax.random.PRNGKey(seed), (B, F), dtype=jnp.float32)
    keep = u > p

    # Lane-density repack: fold k = 128 // H rows into one 128-wide row.
    k = 128 // H if (H < 128 and 128 % H == 0) else 1
    if k > 1 and M % k != 0:
        k = 1
    packed = k > 1

    rows = M // k
    W = k * H
    xf = x.reshape(rows, W)                 # contiguous reshape: free

    tile_m = _pick_tile_m(rows, W * itemsize)
    grid = (pl.cdiv(rows, tile_m),)         # ragged tail handled by masked block

    common = dict(
        out_shape=jax.ShapeDtypeStruct((rows, W), x.dtype),
        out_specs=pl.BlockSpec((tile_m, W), lambda i: (i, 0)),
        grid=grid,
        compiler_params=pltpu.CompilerParams(
            dimension_semantics=("parallel",),
            vmem_limit_bytes=48 * 1024 * 1024,
        ),
        cost_estimate=pl.CostEstimate(
            flops=2 * rows * W,
            transcendentals=0,
            bytes_accessed=2 * rows * W * itemsize + rows * max(k, 1) * 4,
        ),
    )

    if packed:
        kp = max(8, k)                      # pad contraction dim to a sublane tile
        keep_f = keep.astype(jnp.float32).reshape(rows, k)
        expand = jnp.repeat(jnp.eye(k, dtype=jnp.float32), H, axis=1)   # (k, 128)
        if kp > k:
            keep_f = jnp.pad(keep_f, ((0, 0), (0, kp - k)))
            expand = jnp.pad(expand, ((0, kp - k), (0, 0)))
        out = pl.pallas_call(
            _masked_mul_packed_kernel,
            in_specs=[
                pl.BlockSpec((tile_m, W), lambda i: (i, 0)),
                pl.BlockSpec((tile_m, kp), lambda i: (i, 0)),
                pl.BlockSpec((kp, W), lambda i: (0, 0)),
            ],
            **common,
        )(xf, keep_f, expand)
    else:
        keep_d = keep.astype(x.dtype).reshape(rows, 1)
        out = pl.pallas_call(
            _masked_mul_kernel,
            in_specs=[
                pl.BlockSpec((tile_m, W), lambda i: (i, 0)),
                pl.BlockSpec((tile_m, 1), lambda i: (i, 0)),
            ],
            **common,
        )(xf, keep_d)

    return out.reshape(B, F, H)


if __name__ == "__main__":
    key = jax.random.PRNGKey(0)
    p = 0.5
    seed = 1234

    def check(shape):
        kx = jax.random.fold_in(key, shape[1] * 1000 + shape[2])
        x = jax.random.normal(kx, shape, dtype=jnp.float32)

        y = feature_dropout(x, p, seed, training=True)
        jax.block_until_ready(y)
        assert y.shape == x.shape

        # Exact reference of the PyTorch forward (same mask draw, no rescale).
        u = jax.random.uniform(jax.random.PRNGKey(seed), shape[:2],
                               dtype=jnp.float32)
        ref = x * (u > p)[..., None].astype(x.dtype)
        assert bool(jnp.array_equal(y, ref))

        # Every (b, f) embedding is either exactly zeroed or exactly preserved.
        row_zero = jnp.all(y == 0.0, axis=-1)
        row_kept = jnp.all(y == x, axis=-1)
        assert bool(jnp.all(row_zero | row_kept))

        # Determinism: same seed -> same mask (independent of tiling).
        y2 = feature_dropout(x, p, seed, training=True)
        jax.block_until_ready(y2)
        assert bool(jnp.array_equal(y, y2))

        # Eval mode and p == 0 are identity (the module's else-branch).
        assert bool(jnp.array_equal(feature_dropout(x, p, seed, training=False), x))
        assert bool(jnp.array_equal(feature_dropout(x, 0.0, seed, training=True), x))

    check((2, 8, 32))    # H < 128, divides 128 -> lane-packed MXU-expand kernel
    check((2, 8, 48))    # H < 128, no packing   -> sublane-broadcast kernel
    check((2, 5, 128))   # H >= 128, ragged rows -> masked last block

    print("KERNEL_OK")
</pallas_src>

<mosaic_0001>
module attributes {stable_mosaic.version = 11 : i64} {
  func.func @_masked_mul_packed_kernel(%arg0: i32, %arg1: memref<4x128xf32, #tpu.memory_space<vmem>>, %arg2: memref<4x8xf32, #tpu.memory_space<vmem>>, %arg3: memref<8x128xf32, #tpu.memory_space<vmem>>, %arg4: memref<4x128xf32, #tpu.memory_space<vmem>>) attributes {dimension_semantics = [#tpu.dimension_semantics<parallel>], iteration_bounds = array<i64: 1>, scalar_prefetch = 0 : i64, scratch_operands = 0 : i64, tpu.core_type = #tpu.core_type<tc>, window_params = [{transform_indices = @transform_0, window_bounds = array<i64: 4, 128>}, {transform_indices = @transform_1, window_bounds = array<i64: 4, 8>}, {pipeline_mode = #tpu.pipeline_mode<synchronous>, transform_indices = @transform_2, window_bounds = array<i64: 8, 128>}, {transform_indices = @transform_3, window_bounds = array<i64: 4, 128>}]} {
    %c0 = arith.constant 0 : index
    %c0_0 = arith.constant 0 : index
    %0 = vector.load %arg2[%c0, %c0_0] : memref<4x8xf32, #tpu.memory_space<vmem>>, vector<4x8xf32>
    %c0_1 = arith.constant 0 : index
    %c0_2 = arith.constant 0 : index
    %1 = vector.load %arg3[%c0_1, %c0_2] : memref<8x128xf32, #tpu.memory_space<vmem>>, vector<8x128xf32>
    %cst = arith.constant dense<0.000000e+00> : vector<4x128xf32>
    %2 = tpu.matmul %0, %1, %cst {dimension_numbers = #tpu.dot_dimension_numbers<[1], [0], [0], [1], [0, 0, 1, 1], [], []>} : vector<4x8xf32>, vector<8x128xf32>, vector<4x128xf32> -> vector<4x128xf32>
    %c0_3 = arith.constant 0 : index
    %c0_4 = arith.constant 0 : index
    %3 = vector.load %arg1[%c0_3, %c0_4] : memref<4x128xf32, #tpu.memory_space<vmem>>, vector<4x128xf32>
    %4 = arith.mulf %3, %2 : vector<4x128xf32>
    %c0_5 = arith.constant 0 : index
    %c0_6 = arith.constant 0 : index
    %5 = vector.load %arg4[%c0_5, %c0_6] : memref<4x128xf32, #tpu.memory_space<vmem>>, vector<4x128xf32>
    tpu.vector_store %arg4[%c0_5, %c0_6], %4 {strides = array<i32>} : memref<4x128xf32, #tpu.memory_space<vmem>>, vector<4x128xf32>,
    return
  }
  func.func @transform_0(%arg0: i32) -> (i32, i32) {
    %c0_i32 = arith.constant 0 : i32
    %c0_i32_0 = arith.constant 0 : i32
    return %arg0, %c0_i32 : i32, i32
  }
  func.func @transform_1(%arg0: i32) -> (i32, i32) {
    %c0_i32 = arith.constant 0 : i32
    %c0_i32_0 = arith.constant 0 : i32
    return %arg0, %c0_i32 : i32, i32
  }
  func.func @transform_2(%arg0: i32) -> (i32, i32) {
    %c0_i32 = arith.constant 0 : i32
    %c0_i32_0 = arith.constant 0 : i32
    %c0_i32_1 = arith.constant 0 : i32
    return %c0_i32, %c0_i32_0 : i32, i32
  }
  func.func @transform_3(%arg0: i32) -> (i32, i32) {
    %c0_i32 = arith.constant 0 : i32
    %c0_i32_0 = arith.constant 0 : i32
    return %arg0, %c0_i32 : i32, i32
  }
}

</mosaic_0001>

<llo_original>
// kernel: tpu_custom_call.1
$region0: #{tpu_custom_call.1}
  #allocation0 [shape = 'u32[]', space=smem, size = 0x4, offset = 0x4, fixed_abs, tag = 'smem constant byte address 0x4 - core index']
  #allocation1 [shape = 'u32[144,128]{1,0:T(1,128)}', space=vmem, size = 0x12000, scoped, tag = 'internal scratch']
  %s0 = inlined_call_operand.hbm [shape: f32[4,128], index: 0, kind: input, shape index: {}]
  %s1 = inlined_call_operand.hbm [shape: f32[4,8], index: 1, kind: input, shape index: {}]
  %s2 = inlined_call_operand.hbm [shape: f32[8,128], index: 2, kind: input, shape index: {}]
  %s3 = inlined_call_operand.hbm [shape: f32[4,128], index: 3, kind: output, shape index: {}]
  %s4 = sld [smem:[#allocation0]]
  $region34: #{tpu_custom_call.1} parent=0
    _
  %s6 = ssub.s32 1, %s4
  %s7 = scalar_select 0, %s6, %s4
  $region1: #{tpu_custom_call.1} parent=0
    #allocation2 [shape = 'u8[2048]{0}', space=vmem, size = 0x800, scoped, tag = 'input window, operand 0, single buffered']
    #allocation3 [shape = 's32[1]{0}', space=sflag, size = 0x4, scoped, tag = 'scoped memory for tpu_custom_call.1']
    #allocation4 [shape = 's32[1]{0}', space=sflag, size = 0x4, scoped, tag = 'scoped memory for tpu_custom_call.1']
    #allocation5 [shape = 'u8[2048]{0}', space=vmem, size = 0x800, scoped, tag = 'input window, operand 1, single buffered']
    #allocation6 [shape = 's32[1]{0}', space=sflag, size = 0x4, scoped, tag = 'scoped memory for tpu_custom_call.1']
    #allocation7 [shape = 'u8[4096]{0}', space=vmem, size = 0x1000, scoped, tag = 'input window, operand 2, single buffered']
    #allocation8 [shape = 'u8[2048]{0}', space=vmem, size = 0x800, scoped, tag = 'output window, operand 0, single buffered']
    %8 = vsyncpa [#allocation3], 0
    %9 = vsyncpa [#allocation6], 0
    %10 = vsyncpa [#allocation4], 0
    // Predicated region
    $region2: #{tpu_custom_call.1} parent=1 // pred_check
      _
    $region3: #{tpu_custom_call.1} parent=1 // pred_check_branch
      %12 = sbr.rel (0) target = $region5
    $region4: #{tpu_custom_call.1} parent=1 // pred_region
      %s14 = ssub.s32 64, 64
      %15 = vsyncadd [#allocation3], %s14
      %s17 = sshll.u32 [#allocation2], 4
      %s18 = int_to_ptr.vmem [resolvable:$true] %s17
      %20 = dma.hbm_to_vmem [thread:$0]  %s0, 64, %s18, [#allocation3]
    $region5: #{tpu_custom_call.1} parent=1 // pred_fallthru
      _
    // Predicated region
    $region6: #{tpu_custom_call.1} parent=1 // pred_check
      _
    $region7: #{tpu_custom_call.1} parent=1 // pred_check_branch
      %22 = sbr.rel (0) target = $region9
    $region8: #{tpu_custom_call.1} parent=1 // pred_region
      %s24 = ssub.s32 64, 64
      %25 = vsyncadd [#allocation6], %s24
      %s27 = sshll.u32 [#allocation5], 4
      %s28 = int_to_ptr.vmem [resolvable:$true] %s27
      %30 = dma.hbm_to_vmem [thread:$0]  %s1, 64, %s28, [#allocation6]
    $region9: #{tpu_custom_call.1} parent=1 // pred_fallthru
      _
    // Predicated region
    $region10: #{tpu_custom_call.1} parent=1 // pred_check
      _
    $region11: #{tpu_custom_call.1} parent=1 // pred_check_branch
      %32 = sbr.rel (0) target = $region13
    $region12: #{tpu_custom_call.1} parent=1 // pred_region
      %s34 = ssub.s32 128, 128
      %35 = vsyncadd [#allocation6], %s34
      %s37 = sshll.u32 [#allocation7], 4
      %s38 = int_to_ptr.vmem [resolvable:$true] %s37
      %40 = dma.hbm_to_vmem [thread:$0]  %s2, 128, %s38, [#allocation6]
    $region13: #{tpu_custom_call.1} parent=1 // pred_fallthru
      _
    // Predicated region
    $region14: #{tpu_custom_call.1} parent=1 // pred_check
      _
    $region15: #{tpu_custom_call.1} parent=1 // pred_check_branch
      %42 = sbr.rel (0) target = $region17
    $region16: #{tpu_custom_call.1} parent=1 // pred_region
      %43 = dma.done [#allocation3], 64
    $region17: #{tpu_custom_call.1} parent=1 // pred_fallthru
      _
    // Predicated region
    $region18: #{tpu_custom_call.1} parent=1 // pred_check
      _
    $region19: #{tpu_custom_call.1} parent=1 // pred_check_branch
      %45 = sbr.rel (0) target = $region21
    $region20: #{tpu_custom_call.1} parent=1 // pred_region
      %46 = dma.done [#allocation6], 64
    $region21: #{tpu_custom_call.1} parent=1 // pred_fallthru
      _
    // Predicated region
    $region22: #{tpu_custom_call.1} parent=1 // pred_check
      _
    $region23: #{tpu_custom_call.1} parent=1 // pred_check_branch
      %48 = sbr.rel (0) target = $region25
    $region24: #{tpu_custom_call.1} parent=1 // pred_region
      %49 = dma.done [#allocation6], 128
    $region25: #{tpu_custom_call.1} parent=1 // pred_fallthru
      _
    %v50 = vld [vmem:[#allocation5] sm:$0xf]
    %v51 = vld [vmem:[#allocation7] sm:$0xff]
    %vm52 = vcmask 64512
    %v54 = vsel %vm52, %v50, 0
    %56 = vmatprep.subr.mxu0 0.0
    %57 = vmatpush1.msra.mxu0 %v51
    %58 = vmatprep.subr.mxu0 0.0
    %59 = vmatpush1.msra.mxu0 0.0
    %60 = vmatprep.subr.mxu0 0.0
    %61 = vmatpush1.msra.mxu0 0.0
    %62 = vmatprep.subr.mxu0 0.0
    %63 = vmatpush1.msra.mxu0 0.0
    %64 = vmatprep.subr.mxu0 0.0
    %65 = vmatpush1.msra.mxu0 0.0
    %66 = vmatprep.subr.mxu0 0.0
    %67 = vmatpush1.msra.mxu0 0.0
    %68 = vmatprep.subr.mxu0 0.0
    %69 = vmatpush1.msra.mxu0 0.0
    %70 = vmatprep.subr.mxu0 0.0
    %71 = vmatpush1.msra.mxu0 0.0
    %72 = vmatprep.subr.mxu0 0.0
    %73 = vmatpush1.msra.mxu0 0.0
    %74 = vmatprep.subr.mxu0 0.0
    %75 = vmatpush1.msra.mxu0 0.0
    %76 = vmatprep.subr.mxu0 0.0
    %77 = vmatpush1.msra.mxu0 0.0
    %78 = vmatprep.subr.mxu0 0.0
    %79 = vmatpush1.msra.mxu0 0.0
    %80 = vmatprep.subr.mxu0 0.0
    %81 = vmatpush1.msra.mxu0 0.0
    %82 = vmatprep.subr.mxu0 0.0
    %83 = vmatpush1.msra.mxu0 0.0
    %84 = vmatprep.subr.mxu0 0.0
    %85 = vmatpush1.msra.mxu0 0.0
    %86 = vmatprep.subr.mxu0 0.0
    %87 = vmatpush1.msra.mxu0 0.0
    %88 = vmatprep.subr.mxu0 0.0
    %89 = vmatpush1.msra.mxu0 0.0
    %90 = vmatprep.subr.mxu0 0.0
    %91 = vmatpush1.msra.mxu0 0.0
    %92 = vmatprep.subr.mxu0 0.0
    %93 = vmatpush1.msra.mxu0 0.0
    %94 = vmatprep.subr.mxu0 0.0
    %95 = vmatpush1.msra.mxu0 0.0
    %96 = vmatprep.subr.mxu0 0.0
    %97 = vmatpush1.msra.mxu0 0.0
    %98 = vmatprep.subr.mxu0 0.0
    %99 = vmatpush1.msra.mxu0 0.0
    %100 = vmatprep.subr.mxu0 0.0
    %101 = vmatpush1.msra.mxu0 0.0
    %102 = vmatprep.subr.mxu0 0.0
    %103 = vmatpush1.msra.mxu0 0.0
    %104 = vmatprep.subr.mxu0 0.0
    %105 = vmatpush1.msra.mxu0 0.0
    %106 = vmatprep.subr.mxu0 0.0
    %107 = vmatpush1.msra.mxu0 0.0
    %108 = vmatprep.subr.mxu0 0.0
    %109 = vmatpush1.msra.mxu0 0.0
    %110 = vmatprep.subr.mxu0 0.0
    %111 = vmatpush1.msra.mxu0 0.0
    %112 = vmatprep.subr.mxu0 0.0
    %113 = vmatpush1.msra.mxu0 0.0
    %114 = vmatprep.subr.mxu0 0.0
    %115 = vmatpush1.msra.mxu0 0.0
    %116 = vmatprep.subr.mxu0 0.0
    %117 = vmatpush1.msra.mxu0 0.0
    %118 = vmatprep.subr.mxu0 0.0
    %119 = vmatpush1.msra.mxu0 0.0
    %120 = vmatprep.mubr.f32.mxu0 0.0
    %121 = vmatmul.mubr.f32.gmra.mrb[0].mxu0 %v54
    %v122 = vpop.f32.mrb[0].mxu0
    %v123 = vadd.f32 0.0, %v122
    %v124 = vpop.f32.mrb[0].mxu0
    %125 = vdwg.mxu0
    %v126 = vld [vmem:[#allocation2] sm:$0xf]
    %v127 = vmul.f32 %v126, %v123
    %128 = vst [vmem:[#allocation8] sm:$0xf] %v127
    // Predicated region
    $region26: #{tpu_custom_call.1} parent=1 // pred_check
      _
    $region27: #{tpu_custom_call.1} parent=1 // pred_check_branch
      %130 = sbr.rel (0) target = $region29
    $region28: #{tpu_custom_call.1} parent=1 // pred_region
      %s132 = ssub.s32 64, 64
      %133 = vsyncadd [#allocation4], %s132
      %s135 = sshll.u32 [#allocation8], 4
      %s136 = int_to_ptr.vmem [resolvable:$true] %s135
      %138 = dma.vmem_to_hbm [thread:$0]  %s136, 64, %s3, [#allocation4]
    $region29: #{tpu_custom_call.1} parent=1 // pred_fallthru
      _
    // Predicated region
    $region30: #{tpu_custom_call.1} parent=1 // pred_check
      _
    $region31: #{tpu_custom_call.1} parent=1 // pred_check_branch
      %140 = sbr.rel (0) target = $region33
    $region32: #{tpu_custom_call.1} parent=1 // pred_region
      %141 = dma.done [#allocation4], 64
    $region33: #{tpu_custom_call.1} parent=1 // pred_fallthru
      _
    %142 = vsyncpa [#allocation3], 1
    %143 = vsyncpa [#allocation6], 1
    %144 = vsyncpa [#allocation4], 1

</llo_original>
